<compile_context>
chip_gen: v5e
topology: v5e:2x2
jax: 0.10.0
libtpu: 0.0.40
codegen_flags: <defaults>
</compile_context>

<pallas_src>
import jax
import jax.numpy as jnp
import numpy as np
from jax.experimental import pallas as pl
from jax.experimental.pallas import tpu as pltpu


_PAR2 = pltpu.CompilerParams(dimension_semantics=("parallel", "parallel"))


# ----------------------------- Pallas kernels ------------------------------

def _qkv_conv_kernel(p_ref, wq_ref, bq_ref, wk_ref, bk_ref, wv_ref, bv_ref,
                     q_ref, k_ref, v_ref):
    """Fused q/k depthwise 3x3 + v full 3x3 conv on one im2col row tile.

    p_ref : (1, 9*C, TM)  tap-major im2col patches (f32)
    wq/wk : (C, 9) depthwise weights;  bq/bk/bv : (C, 1)
    wv    : (C, 9*C) full-conv weight
    q/k/v : (1, C, TM) outputs, NCHW-flat (lane axis = spatial -> dense stores)
    """
    C, TM = q_ref.shape[1], q_ref.shape[2]
    patches = p_ref[0]                                  # (9C, TM) f32
    wq = wq_ref[...]
    wk = wk_ref[...]

    qa = jnp.zeros((C, TM), jnp.float32)
    ka = jnp.zeros((C, TM), jnp.float32)
    for tap in range(9):                                # VPU, lane-dense, f32
        sl = patches[tap * C:(tap + 1) * C, :]          # (C, TM)
        qa = qa + sl * wq[:, tap:tap + 1]
        ka = ka + sl * wk[:, tap:tap + 1]
    q_ref[0] = qa + bq_ref[...]
    k_ref[0] = ka + bk_ref[...]

    # v = W(C, 9C) @ patches(9C, TM): single MXU GEMM, K = 9*Cin, bf16 in.
    v = jax.lax.dot_general(
        wv_ref[...].astype(jnp.bfloat16), patches.astype(jnp.bfloat16),
        (((1,), (0,)), ((), ())), preferred_element_type=jnp.float32)
    v_ref[0] = v + bv_ref[...]


def _conv_res_kernel(p_ref, w_ref, b_ref, r_ref, o_ref):
    """Full 3x3 conv as one GEMM (K = 9*Cin) with fused residual add."""
    acc = jax.lax.dot_general(
        w_ref[...].astype(jnp.bfloat16), p_ref[0].astype(jnp.bfloat16),
        (((1,), (0,)), ((), ())), preferred_element_type=jnp.float32)
    o_ref[0] = acc + b_ref[...] + r_ref[0]


def _attention_kernel(q_ref, k_ref, v_ref, o_ref):
    """q:(1,TQ,d), k:(1,d,L), v:(1,L,d) -> o:(1,TQ,d).

    Both matmuls contract (last-of-LHS, first-of-RHS) -> no in-kernel
    transposes; bf16 MXU inputs, f32 accumulation and f32 softmax.
    """
    d = q_ref.shape[2]
    scale = float(d) ** -0.5
    q = q_ref[0].astype(jnp.bfloat16)
    k = k_ref[0].astype(jnp.bfloat16)
    s = jax.lax.dot_general(q, k, (((1,), (0,)), ((), ())),
                            preferred_element_type=jnp.float32) * scale
    s = s - jnp.max(s, axis=-1, keepdims=True)
    p = jnp.exp(s)
    p = p * pl.reciprocal(jnp.sum(p, axis=-1, keepdims=True), approx=True)
    o_ref[0] = jax.lax.dot_general(
        p.astype(jnp.bfloat16), v_ref[0].astype(jnp.bfloat16),
        (((1,), (0,)), ((), ())), preferred_element_type=jnp.float32)


# ----------------------------- pallas_call wrappers -------------------------

def qkv_conv(patches, wq, bq, wk, bk, wv, bv):
    N, K9, HW = patches.shape
    C = wq.shape[0]
    tm = 128 if HW % 128 == 0 else HW
    row = lambda i, j: (i, 0, j)
    full = lambda i, j: (0, 0)
    return pl.pallas_call(
        _qkv_conv_kernel,
        out_shape=(jax.ShapeDtypeStruct((N, C, HW), jnp.float32),) * 3,
        grid=(N, HW // tm),
        in_specs=[
            pl.BlockSpec((1, K9, tm), row),
            pl.BlockSpec((C, 9), full), pl.BlockSpec((C, 1), full),
            pl.BlockSpec((C, 9), full), pl.BlockSpec((C, 1), full),
            pl.BlockSpec((C, K9), full), pl.BlockSpec((C, 1), full),
        ],
        out_specs=(pl.BlockSpec((1, C, tm), row),) * 3,
        compiler_params=_PAR2,
    )(patches, wq, bq, wk, bk, wv, bv)


def conv3x3_residual(patches, w, b, res):
    N, K9, HW = patches.shape
    C = w.shape[0]
    tm = 128 if HW % 128 == 0 else HW
    row = lambda i, j: (i, 0, j)
    full = lambda i, j: (0, 0)
    return pl.pallas_call(
        _conv_res_kernel,
        out_shape=jax.ShapeDtypeStruct((N, C, HW), jnp.float32),
        grid=(N, HW // tm),
        in_specs=[
            pl.BlockSpec((1, K9, tm), row),
            pl.BlockSpec((C, K9), full),
            pl.BlockSpec((C, 1), full),
            pl.BlockSpec((1, C, tm), row),
        ],
        out_specs=pl.BlockSpec((1, C, tm), row),
        compiler_params=_PAR2,
    )(patches, w, b, res)


def attention(q_Ld, k_dL, v_Ld):
    BH, L, d = q_Ld.shape
    tq = 128 if L % 128 == 0 else L
    # Note: for very long L on v7x (64 MiB VMEM), the KV axis should also be
    # tiled with an online softmax (flash-style); at basicsr sizes full k/v
    # per head fit comfortably, so only the q axis is tiled here.
    return pl.pallas_call(
        _attention_kernel,
        out_shape=jax.ShapeDtypeStruct((BH, L, d), jnp.float32),
        grid=(BH, L // tq),
        in_specs=[
            pl.BlockSpec((1, tq, d), lambda i, j: (i, j, 0)),
            pl.BlockSpec((1, d, L), lambda i, j: (i, 0, 0)),
            pl.BlockSpec((1, L, d), lambda i, j: (i, 0, 0)),
        ],
        out_specs=pl.BlockSpec((1, tq, d), lambda i, j: (i, j, 0)),
        compiler_params=_PAR2,
    )(q_Ld, k_dL, v_Ld)


# ----------------------------- parameter handling ---------------------------

def init_params(key, num_feat):
    c = num_feat
    ks = jax.random.split(key, 8)

    def w(k, shape):
        return jax.random.normal(k, shape, jnp.float32) * 0.1

    return {
        # PyTorch layouts: depthwise (C, 1, 3, 3); full (Cout, Cin, 3, 3)
        "wq": w(ks[0], (c, 1, 3, 3)), "bq": w(ks[1], (c,)),
        "wk": w(ks[2], (c, 1, 3, 3)), "bk": w(ks[3], (c,)),
        "wv": w(ks[4], (c, c, 3, 3)), "bv": w(ks[5], (c,)),
        "wc": w(ks[6], (c, c, 3, 3)), "bc": w(ks[7], (c,)),
    }


def _dw_flat(W):     # (C, 1, 3, 3) -> (C, 9), tap = kh*3 + kw
    return W[:, 0].reshape(W.shape[0], 9)


def _full_flat(W):   # (Cout, Cin, 3, 3) -> (Cout, 9*Cin), tap-major
    Cout, Cin = W.shape[0], W.shape[1]
    return jnp.transpose(W, (0, 2, 3, 1)).reshape(Cout, 9 * Cin)


def _im2col3x3(x):   # (N, C, H, W) -> (N, 9*C, H*W), tap-major (layout glue)
    N, C, H, W = x.shape
    xp = jnp.pad(x, ((0, 0), (0, 0), (1, 1), (1, 1)))
    taps = [xp[:, :, kh:kh + H, kw:kw + W] for kh in range(3) for kw in range(3)]
    return jnp.stack(taps, axis=1).reshape(N, 9 * C, H * W)


# ----------------------------- forward pass ---------------------------------

def global_attention_forward(x, params, patch_size=4, heads=1):
    b, t, c, h, w = x.shape
    N = b * t
    p = patch_size
    D = p * p * c
    dh = D // heads
    nph, npw = h // p, w // p
    n = nph * npw
    L = t * n

    x_flat = x.reshape(N, c, h * w)

    patches = _im2col3x3(x.reshape(N, c, h, w))

    # Fused q/k/v convolutions (one read of the patches per tile).
    q, k, v = qkv_conv(
        patches,
        _dw_flat(params["wq"]), params["bq"][:, None],
        _dw_flat(params["wk"]), params["bk"][:, None],
        _full_flat(params["wv"]), params["bv"][:, None])

    def unfold(y):   # (N, c, h*w) -> (N, c*p*p, n), torch.nn.Unfold ordering
        y = y.reshape(N, c, nph, p, npw, p)
        y = jnp.transpose(y, (0, 1, 3, 5, 2, 4))
        return y.reshape(N, c * p * p, n)

    def heads_Ld(u):  # (N, D, n) -> (b*heads, t*n, dh)   [q, v layout]
        u = u.reshape(b, t, heads, dh, n)
        return jnp.transpose(u, (0, 2, 1, 4, 3)).reshape(b * heads, L, dh)

    def heads_dL(u):  # (N, D, n) -> (b*heads, dh, t*n)   [k layout]
        u = u.reshape(b, t, heads, dh, n)
        return jnp.transpose(u, (0, 2, 3, 1, 4)).reshape(b * heads, dh, L)

    qa = heads_Ld(unfold(q))
    ka = heads_dL(unfold(k))
    va = heads_Ld(unfold(v))

    ax = attention(qa, ka, va)                           # (b*heads, t*n, dh)

    ax = ax.reshape(b, heads, t, n, dh)
    ax = jnp.transpose(ax, (0, 2, 1, 4, 3)).reshape(N, D, n)

    # Fold (stride == kernel -> exact inverse of unfold)
    f = ax.reshape(N, c, p, p, nph, npw)
    f = jnp.transpose(f, (0, 1, 4, 2, 5, 3)).reshape(N, c, h, w)

    # Final conv with the residual add fused into the kernel epilogue.
    out = conv3x3_residual(_im2col3x3(f), _full_flat(params["wc"]),
                           params["bc"][:, None], x_flat)
    return out.reshape(b, t, c, h, w)


# ----------------------------- pure-JAX reference ----------------------------

def reference_forward(x, params, patch_size=4, heads=1):
    b, t, c, h, w = x.shape
    N = b * t
    p = patch_size
    D = p * p * c
    dh = D // heads
    nph, npw = h // p, w // p
    n = nph * npw
    xf = x.reshape(N, c, h, w)

    def conv(y, W, bias, groups):
        out = jax.lax.conv_general_dilated(
            y, W, window_strides=(1, 1), padding=((1, 1), (1, 1)),
            dimension_numbers=("NCHW", "OIHW", "NCHW"),
            feature_group_count=groups)
        return out + bias[None, :, None, None]

    q = conv(xf, params["wq"], params["bq"], c)
    k = conv(xf, params["wk"], params["bk"], c)
    v = conv(xf, params["wv"], params["bv"], 1)

    def unfold(y):
        y = y.reshape(N, c, nph, p, npw, p)
        y = jnp.transpose(y, (0, 1, 3, 5, 2, 4))
        return y.reshape(N, c * p * p, n)

    def to_heads(u):
        u = u.reshape(b, t, heads, dh, n)
        u = jnp.transpose(u, (0, 2, 3, 1, 4))
        return u.reshape(b * heads, dh, t * n)

    qa, ka, va = to_heads(unfold(q)), to_heads(unfold(k)), to_heads(unfold(v))
    attn = jnp.einsum("bdi,bdj->bij", qa, ka) * (dh ** -0.5)
    attn = jax.nn.softmax(attn, axis=-1)
    ax = jnp.einsum("bij,bdj->bid", attn, va)
    ax = ax.reshape(b, heads, t, n, dh)
    ax = jnp.transpose(ax, (0, 2, 1, 4, 3)).reshape(N, D, n)
    f = ax.reshape(N, c, p, p, nph, npw)
    f = jnp.transpose(f, (0, 1, 4, 2, 5, 3)).reshape(N, c, h, w)
    out = conv(f, params["wc"], params["bc"], 1)
    return out.reshape(b, t, c, h, w) + x


# ----------------------------- main ------------------------------------------

if __name__ == "__main__":
    key = jax.random.PRNGKey(0)
    kx, kp = jax.random.split(key)

    # Small, module-consistent shapes: globalAttention(num_feat=4, patch_size=4,
    # heads=1) on 16x16 frames (the hard-coded 64/8 of the original scales to
    # 16/4 here).
    b, t, num_feat, h, w = 2, 2, 4, 16, 16
    patch_size, heads = 4, 1

    x = jax.random.normal(kx, (b, t, num_feat, h, w), jnp.float32)
    params = init_params(kp, num_feat)

    out = global_attention_forward(x, params, patch_size, heads)
    out = jax.block_until_ready(out)
    assert out.shape == x.shape

    ref = reference_forward(x, params, patch_size, heads)
    # bf16 MXU inputs (f32 accumulation) against an all-f32 reference.
    np.testing.assert_allclose(np.asarray(out), np.asarray(ref),
                               rtol=2e-2, atol=2e-2)

    print("KERNEL_OK")
</pallas_src>

<mosaic_0001>
module attributes {stable_mosaic.version = 11 : i64} {
  func.func @_qkv_conv_kernel(%arg0: i32, %arg1: i32, %arg2: memref<1x36x128xf32, #tpu.memory_space<vmem>>, %arg3: memref<4x9xf32, #tpu.memory_space<vmem>>, %arg4: memref<4x1xf32, #tpu.memory_space<vmem>>, %arg5: memref<4x9xf32, #tpu.memory_space<vmem>>, %arg6: memref<4x1xf32, #tpu.memory_space<vmem>>, %arg7: memref<4x36xf32, #tpu.memory_space<vmem>>, %arg8: memref<4x1xf32, #tpu.memory_space<vmem>>, %arg9: memref<1x4x128xf32, #tpu.memory_space<vmem>>, %arg10: memref<1x4x128xf32, #tpu.memory_space<vmem>>, %arg11: memref<1x4x128xf32, #tpu.memory_space<vmem>>) attributes {dimension_semantics = [#tpu.dimension_semantics<parallel>, #tpu.dimension_semantics<parallel>], iteration_bounds = array<i64: 4, 2>, scalar_prefetch = 0 : i64, scratch_operands = 0 : i64, tpu.core_type = #tpu.core_type<tc>, window_params = [{transform_indices = @transform_0, window_bounds = array<i64: 1, 36, 128>}, {pipeline_mode = #tpu.pipeline_mode<synchronous>, transform_indices = @transform_1, window_bounds = array<i64: 4, 9>}, {pipeline_mode = #tpu.pipeline_mode<synchronous>, transform_indices = @transform_2, window_bounds = array<i64: 4, 1>}, {pipeline_mode = #tpu.pipeline_mode<synchronous>, transform_indices = @transform_3, window_bounds = array<i64: 4, 9>}, {pipeline_mode = #tpu.pipeline_mode<synchronous>, transform_indices = @transform_4, window_bounds = array<i64: 4, 1>}, {pipeline_mode = #tpu.pipeline_mode<synchronous>, transform_indices = @transform_5, window_bounds = array<i64: 4, 36>}, {pipeline_mode = #tpu.pipeline_mode<synchronous>, transform_indices = @transform_6, window_bounds = array<i64: 4, 1>}, {transform_indices = @transform_7, window_bounds = array<i64: 1, 4, 128>}, {transform_indices = @transform_8, window_bounds = array<i64: 1, 4, 128>}, {transform_indices = @transform_9, window_bounds = array<i64: 1, 4, 128>}]} {
    %c0 = arith.constant 0 : index
    %c0_0 = arith.constant 0 : index
    %c0_1 = arith.constant 0 : index
    %0 = vector.load %arg2[%c0, %c0_0, %c0_1] : memref<1x36x128xf32, #tpu.memory_space<vmem>>, vector<1x36x128xf32>
    %1 = vector.shape_cast %0 : vector<1x36x128xf32> to vector<36x128xf32>
    %c0_2 = arith.constant 0 : index
    %c0_3 = arith.constant 0 : index
    %2 = vector.load %arg3[%c0_2, %c0_3] : memref<4x9xf32, #tpu.memory_space<vmem>>, vector<4x9xf32>
    %c0_4 = arith.constant 0 : index
    %c0_5 = arith.constant 0 : index
    %3 = vector.load %arg5[%c0_4, %c0_5] : memref<4x9xf32, #tpu.memory_space<vmem>>, vector<4x9xf32>
    %cst = arith.constant 0.000000e+00 : f32
    %4 = vector.broadcast %cst : f32 to vector<4x128xf32>
    %cst_6 = arith.constant 0.000000e+00 : f32
    %5 = vector.broadcast %cst_6 : f32 to vector<4x128xf32>
    %6 = vector.extract_strided_slice %1 {offsets = [0, 0], sizes = [4, 128], strides = [1, 1]} : vector<36x128xf32> to vector<4x128xf32>
    %7 = vector.extract_strided_slice %2 {offsets = [0, 0], sizes = [4, 1], strides = [1, 1]} : vector<4x9xf32> to vector<4x1xf32>
    %8 = vector.broadcast %7 : vector<4x1xf32> to vector<4x128xf32>
    %9 = arith.mulf %6, %8 : vector<4x128xf32>
    %10 = arith.addf %4, %9 : vector<4x128xf32>
    %11 = vector.extract_strided_slice %3 {offsets = [0, 0], sizes = [4, 1], strides = [1, 1]} : vector<4x9xf32> to vector<4x1xf32>
    %12 = vector.broadcast %11 : vector<4x1xf32> to vector<4x128xf32>
    %13 = arith.mulf %6, %12 : vector<4x128xf32>
    %14 = arith.addf %5, %13 : vector<4x128xf32>
    %15 = vector.extract_strided_slice %1 {offsets = [4, 0], sizes = [4, 128], strides = [1, 1]} : vector<36x128xf32> to vector<4x128xf32>
    %16 = vector.extract_strided_slice %2 {offsets = [0, 1], sizes = [4, 1], strides = [1, 1]} : vector<4x9xf32> to vector<4x1xf32>
    %17 = vector.broadcast %16 : vector<4x1xf32> to vector<4x128xf32>
    %18 = arith.mulf %15, %17 : vector<4x128xf32>
    %19 = arith.addf %10, %18 : vector<4x128xf32>
    %20 = vector.extract_strided_slice %3 {offsets = [0, 1], sizes = [4, 1], strides = [1, 1]} : vector<4x9xf32> to vector<4x1xf32>
    %21 = vector.broadcast %20 : vector<4x1xf32> to vector<4x128xf32>
    %22 = arith.mulf %15, %21 : vector<4x128xf32>
    %23 = arith.addf %14, %22 : vector<4x128xf32>
    %24 = vector.extract_strided_slice %1 {offsets = [8, 0], sizes = [4, 128], strides = [1, 1]} : vector<36x128xf32> to vector<4x128xf32>
    %25 = vector.extract_strided_slice %2 {offsets = [0, 2], sizes = [4, 1], strides = [1, 1]} : vector<4x9xf32> to vector<4x1xf32>
    %26 = vector.broadcast %25 : vector<4x1xf32> to vector<4x128xf32>
    %27 = arith.mulf %24, %26 : vector<4x128xf32>
    %28 = arith.addf %19, %27 : vector<4x128xf32>
    %29 = vector.extract_strided_slice %3 {offsets = [0, 2], sizes = [4, 1], strides = [1, 1]} : vector<4x9xf32> to vector<4x1xf32>
    %30 = vector.broadcast %29 : vector<4x1xf32> to vector<4x128xf32>
    %31 = arith.mulf %24, %30 : vector<4x128xf32>
    %32 = arith.addf %23, %31 : vector<4x128xf32>
    %33 = vector.extract_strided_slice %1 {offsets = [12, 0], sizes = [4, 128], strides = [1, 1]} : vector<36x128xf32> to vector<4x128xf32>
    %34 = vector.extract_strided_slice %2 {offsets = [0, 3], sizes = [4, 1], strides = [1, 1]} : vector<4x9xf32> to vector<4x1xf32>
    %35 = vector.broadcast %34 : vector<4x1xf32> to vector<4x128xf32>
    %36 = arith.mulf %33, %35 : vector<4x128xf32>
    %37 = arith.addf %28, %36 : vector<4x128xf32>
    %38 = vector.extract_strided_slice %3 {offsets = [0, 3], sizes = [4, 1], strides = [1, 1]} : vector<4x9xf32> to vector<4x1xf32>
    %39 = vector.broadcast %38 : vector<4x1xf32> to vector<4x128xf32>
    %40 = arith.mulf %33, %39 : vector<4x128xf32>
    %41 = arith.addf %32, %40 : vector<4x128xf32>
    %42 = vector.extract_strided_slice %1 {offsets = [16, 0], sizes = [4, 128], strides = [1, 1]} : vector<36x128xf32> to vector<4x128xf32>
    %43 = vector.extract_strided_slice %2 {offsets = [0, 4], sizes = [4, 1], strides = [1, 1]} : vector<4x9xf32> to vector<4x1xf32>
    %44 = vector.broadcast %43 : vector<4x1xf32> to vector<4x128xf32>
    %45 = arith.mulf %42, %44 : vector<4x128xf32>
    %46 = arith.addf %37, %45 : vector<4x128xf32>
    %47 = vector.extract_strided_slice %3 {offsets = [0, 4], sizes = [4, 1], strides = [1, 1]} : vector<4x9xf32> to vector<4x1xf32>
    %48 = vector.broadcast %47 : vector<4x1xf32> to vector<4x128xf32>
    %49 = arith.mulf %42, %48 : vector<4x128xf32>
    %50 = arith.addf %41, %49 : vector<4x128xf32>
    %51 = vector.extract_strided_slice %1 {offsets = [20, 0], sizes = [4, 128], strides = [1, 1]} : vector<36x128xf32> to vector<4x128xf32>
    %52 = vector.extract_strided_slice %2 {offsets = [0, 5], sizes = [4, 1], strides = [1, 1]} : vector<4x9xf32> to vector<4x1xf32>
    %53 = vector.broadcast %52 : vector<4x1xf32> to vector<4x128xf32>
    %54 = arith.mulf %51, %53 : vector<4x128xf32>
    %55 = arith.addf %46, %54 : vector<4x128xf32>
    %56 = vector.extract_strided_slice %3 {offsets = [0, 5], sizes = [4, 1], strides = [1, 1]} : vector<4x9xf32> to vector<4x1xf32>
    %57 = vector.broadcast %56 : vector<4x1xf32> to vector<4x128xf32>
    %58 = arith.mulf %51, %57 : vector<4x128xf32>
    %59 = arith.addf %50, %58 : vector<4x128xf32>
    %60 = vector.extract_strided_slice %1 {offsets = [24, 0], sizes = [4, 128], strides = [1, 1]} : vector<36x128xf32> to vector<4x128xf32>
    %61 = vector.extract_strided_slice %2 {offsets = [0, 6], sizes = [4, 1], strides = [1, 1]} : vector<4x9xf32> to vector<4x1xf32>
    %62 = vector.broadcast %61 : vector<4x1xf32> to vector<4x128xf32>
    %63 = arith.mulf %60, %62 : vector<4x128xf32>
    %64 = arith.addf %55, %63 : vector<4x128xf32>
    %65 = vector.extract_strided_slice %3 {offsets = [0, 6], sizes = [4, 1], strides = [1, 1]} : vector<4x9xf32> to vector<4x1xf32>
    %66 = vector.broadcast %65 : vector<4x1xf32> to vector<4x128xf32>
    %67 = arith.mulf %60, %66 : vector<4x128xf32>
    %68 = arith.addf %59, %67 : vector<4x128xf32>
    %69 = vector.extract_strided_slice %1 {offsets = [28, 0], sizes = [4, 128], strides = [1, 1]} : vector<36x128xf32> to vector<4x128xf32>
    %70 = vector.extract_strided_slice %2 {offsets = [0, 7], sizes = [4, 1], strides = [1, 1]} : vector<4x9xf32> to vector<4x1xf32>
    %71 = vector.broadcast %70 : vector<4x1xf32> to vector<4x128xf32>
    %72 = arith.mulf %69, %71 : vector<4x128xf32>
    %73 = arith.addf %64, %72 : vector<4x128xf32>
    %74 = vector.extract_strided_slice %3 {offsets = [0, 7], sizes = [4, 1], strides = [1, 1]} : vector<4x9xf32> to vector<4x1xf32>
    %75 = vector.broadcast %74 : vector<4x1xf32> to vector<4x128xf32>
    %76 = arith.mulf %69, %75 : vector<4x128xf32>
    %77 = arith.addf %68, %76 : vector<4x128xf32>
    %78 = vector.extract_strided_slice %1 {offsets = [32, 0], sizes = [4, 128], strides = [1, 1]} : vector<36x128xf32> to vector<4x128xf32>
    %79 = vector.extract_strided_slice %2 {offsets = [0, 8], sizes = [4, 1], strides = [1, 1]} : vector<4x9xf32> to vector<4x1xf32>
    %80 = vector.broadcast %79 : vector<4x1xf32> to vector<4x128xf32>
    %81 = arith.mulf %78, %80 : vector<4x128xf32>
    %82 = arith.addf %73, %81 : vector<4x128xf32>
    %83 = vector.extract_strided_slice %3 {offsets = [0, 8], sizes = [4, 1], strides = [1, 1]} : vector<4x9xf32> to vector<4x1xf32>
    %84 = vector.broadcast %83 : vector<4x1xf32> to vector<4x128xf32>
    %85 = arith.mulf %78, %84 : vector<4x128xf32>
    %86 = arith.addf %77, %85 : vector<4x128xf32>
    %c0_7 = arith.constant 0 : index
    %c0_8 = arith.constant 0 : index
    %87 = vector.load %arg4[%c0_7, %c0_8] : memref<4x1xf32, #tpu.memory_space<vmem>>, vector<4x1xf32>
    %88 = vector.broadcast %87 : vector<4x1xf32> to vector<4x128xf32>
    %89 = arith.addf %82, %88 : vector<4x128xf32>
    %c0_9 = arith.constant 0 : index
    %c0_10 = arith.constant 0 : index
    %c0_11 = arith.constant 0 : index
    %90 = vector.load %arg9[%c0_9, %c0_10, %c0_11] : memref<1x4x128xf32, #tpu.memory_space<vmem>>, vector<1x4x128xf32>
    %91 = vector.shape_cast %90 : vector<1x4x128xf32> to vector<4x128xf32>
    %92 = vector.shape_cast %89 : vector<4x128xf32> to vector<1x4x128xf32>
    tpu.vector_store %arg9[%c0_9, %c0_10, %c0_11], %92 {strides = array<i32>} : memref<1x4x128xf32, #tpu.memory_space<vmem>>, vector<1x4x128xf32>,
    %c0_12 = arith.constant 0 : index
    %c0_13 = arith.constant 0 : index
    %93 = vector.load %arg6[%c0_12, %c0_13] : memref<4x1xf32, #tpu.memory_space<vmem>>, vector<4x1xf32>
    %94 = vector.broadcast %93 : vector<4x1xf32> to vector<4x128xf32>
    %95 = arith.addf %86, %94 : vector<4x128xf32>
    %c0_14 = arith.constant 0 : index
    %c0_15 = arith.constant 0 : index
    %c0_16 = arith.constant 0 : index
    %96 = vector.load %arg10[%c0_14, %c0_15, %c0_16] : memref<1x4x128xf32, #tpu.memory_space<vmem>>, vector<1x4x128xf32>
    %97 = vector.shape_cast %96 : vector<1x4x128xf32> to vector<4x128xf32>
    %98 = vector.shape_cast %95 : vector<4x128xf32> to vector<1x4x128xf32>
    tpu.vector_store %arg10[%c0_14, %c0_15, %c0_16], %98 {strides = array<i32>} : memref<1x4x128xf32, #tpu.memory_space<vmem>>, vector<1x4x128xf32>,
    %c0_17 = arith.constant 0 : index
    %c0_18 = arith.constant 0 : index
    %99 = vector.load %arg7[%c0_17, %c0_18] : memref<4x36xf32, #tpu.memory_space<vmem>>, vector<4x36xf32>
    %100 = arith.truncf %99 : vector<4x36xf32> to vector<4x36xbf16>
    %101 = arith.truncf %1 : vector<36x128xf32> to vector<36x128xbf16>
    %cst_19 = arith.constant dense<0.000000e+00> : vector<4x128xf32>
    %102 = tpu.matmul %100, %101, %cst_19 {dimension_numbers = #tpu.dot_dimension_numbers<[1], [0], [0], [1], [0, 0, 1, 1], [], []>} : vector<4x36xbf16>, vector<36x128xbf16>, vector<4x128xf32> -> vector<4x128xf32>
    %c0_20 = arith.constant 0 : index
    %c0_21 = arith.constant 0 : index
    %103 = vector.load %arg8[%c0_20, %c0_21] : memref<4x1xf32, #tpu.memory_space<vmem>>, vector<4x1xf32>
    %104 = vector.broadcast %103 : vector<4x1xf32> to vector<4x128xf32>
    %105 = arith.addf %102, %104 : vector<4x128xf32>
    %c0_22 = arith.constant 0 : index
    %c0_23 = arith.constant 0 : index
    %c0_24 = arith.constant 0 : index
    %106 = vector.load %arg11[%c0_22, %c0_23, %c0_24] : memref<1x4x128xf32, #tpu.memory_space<vmem>>, vector<1x4x128xf32>
    %107 = vector.shape_cast %106 : vector<1x4x128xf32> to vector<4x128xf32>
    %108 = vector.shape_cast %105 : vector<4x128xf32> to vector<1x4x128xf32>
    tpu.vector_store %arg11[%c0_22, %c0_23, %c0_24], %108 {strides = array<i32>} : memref<1x4x128xf32, #tpu.memory_space<vmem>>, vector<1x4x128xf32>,
    return
  }
  func.func @transform_0(%arg0: i32, %arg1: i32) -> (i32, i32, i32) {
    %c0_i32 = arith.constant 0 : i32
    %c0_i32_0 = arith.constant 0 : i32
    return %arg0, %c0_i32, %arg1 : i32, i32, i32
  }
  func.func @transform_1(%arg0: i32, %arg1: i32) -> (i32, i32) {
    %c0_i32 = arith.constant 0 : i32
    %c0_i32_0 = arith.constant 0 : i32
    %c0_i32_1 = arith.constant 0 : i32
    return %c0_i32, %c0_i32_0 : i32, i32
  }
  func.func @transform_2(%arg0: i32, %arg1: i32) -> (i32, i32) {
    %c0_i32 = arith.constant 0 : i32
    %c0_i32_0 = arith.constant 0 : i32
    %c0_i32_1 = arith.constant 0 : i32
    return %c0_i32, %c0_i32_0 : i32, i32
  }
  func.func @transform_3(%arg0: i32, %arg1: i32) -> (i32, i32) {
    %c0_i32 = arith.constant 0 : i32
    %c0_i32_0 = arith.constant 0 : i32
    %c0_i32_1 = arith.constant 0 : i32
    return %c0_i32, %c0_i32_0 : i32, i32
  }
  func.func @transform_4(%arg0: i32, %arg1: i32) -> (i32, i32) {
    %c0_i32 = arith.constant 0 : i32
    %c0_i32_0 = arith.constant 0 : i32
    %c0_i32_1 = arith.constant 0 : i32
    return %c0_i32, %c0_i32_0 : i32, i32
  }
  func.func @transform_5(%arg0: i32, %arg1: i32) -> (i32, i32) {
    %c0_i32 = arith.constant 0 : i32
    %c0_i32_0 = arith.constant 0 : i32
    %c0_i32_1 = arith.constant 0 : i32
    return %c0_i32, %c0_i32_0 : i32, i32
  }
  func.func @transform_6(%arg0: i32, %arg1: i32) -> (i32, i32) {
    %c0_i32 = arith.constant 0 : i32
    %c0_i32_0 = arith.constant 0 : i32
    %c0_i32_1 = arith.constant 0 : i32
    return %c0_i32, %c0_i32_0 : i32, i32
  }
  func.func @transform_7(%arg0: i32, %arg1: i32) -> (i32, i32, i32) {
    %c0_i32 = arith.constant 0 : i32
    %c0_i32_0 = arith.constant 0 : i32
    return %arg0, %c0_i32, %arg1 : i32, i32, i32
  }
  func.func @transform_8(%arg0: i32, %arg1: i32) -> (i32, i32, i32) {
    %c0_i32 = arith.constant 0 : i32
    %c0_i32_0 = arith.constant 0 : i32
    return %arg0, %c0_i32, %arg1 : i32, i32, i32
  }
  func.func @transform_9(%arg0: i32, %arg1: i32) -> (i32, i32, i32) {
    %c0_i32 = arith.constant 0 : i32
    %c0_i32_0 = arith.constant 0 : i32
    return %arg0, %c0_i32, %arg1 : i32, i32, i32
  }
}

</mosaic_0001>

<llo_original>
// kernel: tpu_custom_call.1
$region0: #{tpu_custom_call.1}
  #allocation0 [shape = 'u32[]', space=smem, size = 0x4, offset = 0x4, fixed_abs, tag = 'smem constant byte address 0x4 - core index']
  #allocation1 [shape = 'u32[72,128]{1,0:T(1,128)}', space=vmem, size = 0x9000, scoped, tag = 'internal scratch']
  %s0 = inlined_call_operand.vmem [shape: f32[4,36,256], index: 0, kind: input, shape index: {}]
  %s1 = inlined_call_operand.vmem [shape: f32[4,9], index: 1, kind: input, shape index: {}]
  %s2 = inlined_call_operand.vmem [shape: f32[4,1], index: 2, kind: input, shape index: {}]
  %s3 = inlined_call_operand.vmem [shape: f32[4,9], index: 3, kind: input, shape index: {}]
  %s4 = inlined_call_operand.vmem [shape: f32[4,1], index: 4, kind: input, shape index: {}]
  %s5 = inlined_call_operand.vmem [shape: f32[4,36], index: 5, kind: input, shape index: {}]
  %s6 = inlined_call_operand.vmem [shape: f32[4,1], index: 6, kind: input, shape index: {}]
  %s7 = inlined_call_operand.hbm [shape: f32[4,4,256], index: 7, kind: output, shape index: {0}]
  %s8 = inlined_call_operand.hbm [shape: f32[4,4,256], index: 8, kind: output, shape index: {1}]
  %s9 = inlined_call_operand.hbm [shape: f32[4,4,256], index: 9, kind: output, shape index: {2}]
  %10 = xla_tuple %s7, %s8, %s9
  %s11 = sld [smem:[#allocation0]]
  $region115: #{tpu_custom_call.1} parent=0
    _
  %s13 = ssub.s32 1, %s11
  %s14 = scalar_select 0, %s13, %s11
  $region1: #{tpu_custom_call.1} parent=0
    #allocation2 [shape = 'u8[40960]{0}', space=vmem, size = 0xa000, scoped, tag = 'input window, operand 0']
    #allocation3 [shape = 'u8[4096]{0}', space=vmem, size = 0x1000, scoped, tag = 'output window, operand 0']
    #allocation4 [shape = 's32[2]{0}', space=sflag, size = 0x8, scoped, tag = 'scoped memory for tpu_custom_call.1']
    #allocation5 [shape = 'u8[4096]{0}', space=vmem, size = 0x1000, scoped, tag = 'output window, operand 1']
    #allocation6 [shape = 's32[2]{0}', space=sflag, size = 0x8, scoped, tag = 'scoped memory for tpu_custom_call.1']
    #allocation7 [shape = 'u8[4096]{0}', space=vmem, size = 0x1000, scoped, tag = 'output window, operand 2']
    %15 = vsyncpa [#allocation4], 0
    %s16 = scalar_lea.sflag [#allocation4], 1
    %17 = vsyncpa %s16, 0
    %18 = vsyncpa [#allocation6], 0
    %s19 = scalar_lea.sflag [#allocation6], 1
    %20 = vsyncpa %s19, 0
    loop: start=0, step=1, limit=10
    $region2: #{tpu_custom_call.1} parent=1 // loop_pre_header
      _
    $region3: #{tpu_custom_call.1} parent=1 // loop_header
      %s22 = sphi 0, %s26
      %p23 = scmp.ge.s32.totalorder %s22, 10
      %s29 = sphi 0, %s41
      %s30 = sphi 0, %s37
      %s31 = sphi 0, %s29
      %s32 = sphi 0, %s30
      %s33 = sphi 0, %s31
      %s34 = sphi 0, %s32
      %s46 = sphi 0, %s48
      %s49 = sphi 0, %s46
      %s50 = sphi 0, %s49
      %s66 = sphi 0, %s50
      %s70 = sphi 0, %s70
      %s72 = sphi 0, %s70
      %s73 = sphi 0, %s72
      %s87 = sphi 0, %s73
      %s91 = sphi 0, %s91
      %s93 = sphi 0, %s91
      %s94 = sphi 0, %s93
      %s108 = sphi 0, %s94
      %s112 = sphi 0, %s112
      %s114 = sphi 0, %s112
      %s115 = sphi 0, %s114
      %s129 = sphi 0, %s115
      %s133 = sphi 0, %s133
      %s135 = sphi 0, %s133
      %s136 = sphi 0, %s135
      %s150 = sphi 0, %s136
      %s154 = sphi 0, %s154
      %s156 = sphi 0, %s154
      %s157 = sphi 0, %s156
      %s171 = sphi 0, %s157
      %s175 = sphi 0, %s175
      %s177 = sphi 0, %s175
      %s178 = sphi 0, %s177
      %s192 = sphi 0, %s178
      %s200 = sphi 0, %s202
      %s203 = sphi 0, %s200
      %s204 = sphi 0, %s203
      %s220 = sphi 0, %s204
      %s228 = sphi 0, %s230
      %s231 = sphi 0, %s228
      %s232 = sphi 0, %s231
      %s248 = sphi 0, %s232
      %s256 = sphi 0, %s258
      %s259 = sphi 0, %s256
      %s260 = sphi 0, %s259
      %s276 = sphi 0, %s260
    $region4: #{tpu_custom_call.1} parent=1 // loop_header_branch
      %25 = sbr.rel (%p23) target = $region8
    $region5: #{tpu_custom_call.1} parent=1 // loop_body
      %s27 = ssub.s32 %s22, 1
      %s28 = ssub.s32 %s22, 2
      %s35 = sadd.s32 1, %s30
      %p36 = scmp.ge.s32.totalorder %s35, 2
      %s37 = scalar_select %p36, 0, %s35
      %s38 = sadd.s32 1, %s29
      %s39 = scalar_select %p36, %s38, %s29
      %p40 = scmp.ge.s32.totalorder %s39, 4
      %s41 = scalar_select %p40, 0, %s39
      %s42 = ssub.s32 %s29, %s41
      %s43 = ssub.s32 %s30, %s37
      %s44 = sor.u32 %s42, %s43
      %p45 = scmp.eq.s32.totalorder %s44, 0
      %s47 = sadd.s32 %s46, 1
      %s48 = scalar_select %p45, %s46, %s47
      %p51 = pneg %p45
      %p52 = scmp.eq.s32.totalorder %s22, 7
      %p53 = por %p51, %p52
      %p54 = scmp.ne.s32.totalorder %s46, %s49
      %p55 = scmp.eq.s32.totalorder %s22, 0
      %p56 = por %p54, %p55
      %p57 = scmp.ne.s32.totalorder %s46, %s49
      %p58 = scmp.eq.s32.totalorder %s27, 7
      %p59 = por %p57, %p58
      %p60 = scmp.ne.s32.totalorder %s49, %s50
      %p61 = scmp.eq.s32.totalorder %s27, 0
      %p62 = por %p60, %p61
      %p63 = scmp.ne.s32.totalorder %s49, %s50
      %p64 = scmp.eq.s32.totalorder %s28, 7
      %p65 = por %p63, %p64
      %p67 = scmp.ne.s32.totalorder %s50, %s66
      %p68 = scmp.eq.s32.totalorder %s28, 0
      %p69 = por %p67, %p68
      %s71 = sadd.s32 %s70, 1
      %p74 = scmp.eq.s32.totalorder %s22, 7
      %p75 = scmp.ne.s32.totalorder %s70, %s72
      %p76 = scmp.eq.s32.totalorder %s22, 0
      %p77 = por %p75, %p76
      %p78 = scmp.ne.s32.totalorder %s70, %s72
      %p79 = scmp.eq.s32.totalorder %s27, 7
      %p80 = por %p78, %p79
      %p81 = scmp.ne.s32.totalorder %s72, %s73
      %p82 = scmp.eq.s32.totalorder %s27, 0
      %p83 = por %p81, %p82
      %p84 = scmp.ne.s32.totalorder %s72, %s73
      %p85 = scmp.eq.s32.totalorder %s28, 7
      %p86 = por %p84, %p85
      %p88 = scmp.ne.s32.totalorder %s73, %s87
      %p89 = scmp.eq.s32.totalorder %s28, 0
      %p90 = por %p88, %p89
      %s92 = sadd.s32 %s91, 1
      %p95 = scmp.eq.s32.totalorder %s22, 7
      %p96 = scmp.ne.s32.totalorder %s91, %s93
      %p97 = scmp.eq.s32.totalorder %s22, 0
      %p98 = por %p96, %p97
      %p99 = scmp.ne.s32.totalorder %s91, %s93
      %p100 = scmp.eq.s32.totalorder %s27, 7
      %p101 = por %p99, %p100
      %p102 = scmp.ne.s32.totalorder %s93, %s94
      %p103 = scmp.eq.s32.totalorder %s27, 0
      %p104 = por %p102, %p103
      %p105 = scmp.ne.s32.totalorder %s93, %s94
      %p106 = scmp.eq.s32.totalorder %s28, 7
      %p107 = por %p105, %p106
      %p109 = scmp.ne.s32.totalorder %s94, %s108
      %p110 = scmp.eq.s32.totalorder %s28, 0
      %p111 = por %p109, %p110
      %s113 = sadd.s32 %s112, 1
      %p116 = scmp.eq.s32.totalorder %s22, 7
      %p117 = scmp.ne.s32.totalorder %s112, %s114
      %p118 = scmp.eq.s32.totalorder %s22, 0
      %p119 = por %p117, %p118
      %p120 = scmp.ne.s32.totalorder %s112, %s114
      %p121 = scmp.eq.s32.totalorder %s27, 7
      %p122 = por %p120, %p121
      %p123 = scmp.ne.s32.totalorder %s114, %s115
      %p124 = scmp.eq.s32.totalorder %s27, 0
      %p125 = por %p123, %p124
      %p126 = scmp.ne.s32.totalorder %s114, %s115
      %p127 = scmp.eq.s32.totalorder %s28, 7
      %p128 = por %p126, %p127
      %p130 = scmp.ne.s32.totalorder %s115, %s129
      %p131 = scmp.eq.s32.totalorder %s28, 0
      %p132 = por %p130, %p131
      %s134 = sadd.s32 %s133, 1
      %p137 = scmp.eq.s32.totalorder %s22, 7
      %p138 = scmp.ne.s32.totalorder %s133, %s135
      %p139 = scmp.eq.s32.totalorder %s22, 0
      %p140 = por %p138, %p139
      %p141 = scmp.ne.s32.totalorder %s133, %s135
      %p142 = scmp.eq.s32.totalorder %s27, 7
      %p143 = por %p141, %p142
      %p144 = scmp.ne.s32.totalorder %s135, %s136
      %p145 = scmp.eq.s32.totalorder %s27, 0
      %p146 = por %p144, %p145
      %p147 = scmp.ne.s32.totalorder %s135, %s136
      %p148 = scmp.eq.s32.totalorder %s28, 7
      %p149 = por %p147, %p148
      %p151 = scmp.ne.s32.totalorder %s136, %s150
      %p152 = scmp.eq.s32.totalorder %s28, 0
      %p153 = por %p151, %p152
      %s155 = sadd.s32 %s154, 1
      %p158 = scmp.eq.s32.totalorder %s22, 7
      %p159 = scmp.ne.s32.totalorder %s154, %s156
      %p160 = scmp.eq.s32.totalorder %s22, 0
      %p161 = por %p159, %p160
      %p162 = scmp.ne.s32.totalorder %s154, %s156
      %p163 = scmp.eq.s32.totalorder %s27, 7
      %p164 = por %p162, %p163
      %p165 = scmp.ne.s32.totalorder %s156, %s157
      %p166 = scmp.eq.s32.totalorder %s27, 0
      %p167 = por %p165, %p166
      %p168 = scmp.ne.s32.totalorder %s156, %s157
      %p169 = scmp.eq.s32.totalorder %s28, 7
      %p170 = por %p168, %p169
      %p172 = scmp.ne.s32.totalorder %s157, %s171
      %p173 = scmp.eq.s32.totalorder %s28, 0
      %p174 = por %p172, %p173
      %s176 = sadd.s32 %s175, 1
      %p179 = scmp.eq.s32.totalorder %s22, 7
      %p180 = scmp.ne.s32.totalorder %s175, %s177
      %p181 = scmp.eq.s32.totalorder %s22, 0
      %p182 = por %p180, %p181
      %p183 = scmp.ne.s32.totalorder %s175, %s177
      %p184 = scmp.eq.s32.totalorder %s27, 7
      %p185 = por %p183, %p184
      %p186 = scmp.ne.s32.totalorder %s177, %s178
      %p187 = scmp.eq.s32.totalorder %s27, 0
      %p188 = por %p186, %p187
      %p189 = scmp.ne.s32.totalorder %s177, %s178
      %p190 = scmp.eq.s32.totalorder %s28, 7
      %p191 = por %p189, %p190
      %p193 = scmp.ne.s32.totalorder %s178, %s192
      %p194 = scmp.eq.s32.totalorder %s28, 0
      %p195 = por %p193, %p194
      %s196 = ssub.s32 %s29, %s41
      %s197 = ssub.s32 %s30, %s37
      %s198 = sor.u32 %s196, %s197
      %p199 = scmp.eq.s32.totalorder %s198, 0
      %s201 = sadd.s32 %s200, 1
      %s202 = scalar_select %p199, %s200, %s201
      %p205 = pneg %p199
      %p206 = scmp.eq.s32.totalorder %s22, 7
      %p207 = por %p205, %p206
      %p208 = scmp.ne.s32.totalorder %s200, %s203
      %p209 = scmp.eq.s32.totalorder %s22, 0
      %p210 = por %p208, %p209
      %p211 = scmp.ne.s32.totalorder %s200, %s203
      %p212 = scmp.eq.s32.totalorder %s27, 7
      %p213 = por %p211, %p212
      %p214 = scmp.ne.s32.totalorder %s203, %s204
      %p215 = scmp.eq.s32.totalorder %s27, 0
      %p216 = por %p214, %p215
      %p217 = scmp.ne.s32.totalorder %s203, %s204
      %p218 = scmp.eq.s32.totalorder %s28, 7
      %p219 = por %p217, %p218
      %p221 = scmp.ne.s32.totalorder %s204, %s220
      %p222 = scmp.eq.s32.totalorder %s28, 0
      %p223 = por %p221, %p222
      %s224 = ssub.s32 %s29, %s41
      %s225 = ssub.s32 %s30, %s37
      %s226 = sor.u32 %s224, %s225
      %p227 = scmp.eq.s32.totalorder %s226, 0
      %s229 = sadd.s32 %s228, 1
      %s230 = scalar_select %p227, %s228, %s229
      %p233 = pneg %p227
      %p234 = scmp.eq.s32.totalorder %s22, 7
      %p235 = por %p233, %p234
      %p236 = scmp.ne.s32.totalorder %s228, %s231
      %p237 = scmp.eq.s32.totalorder %s22, 0
      %p238 = por %p236, %p237
      %p239 = scmp.ne.s32.totalorder %s228, %s231
      %p240 = scmp.eq.s32.totalorder %s27, 7
      %p241 = por %p239, %p240
      %p242 = scmp.ne.s32.totalorder %s231, %s232
      %p243 = scmp.eq.s32.totalorder %s27, 0
      %p244 = por %p242, %p243
      %p245 = scmp.ne.s32.totalorder %s231, %s232
      %p246 = scmp.eq.s32.totalorder %s28, 7
      %p247 = por %p245, %p246
      %p249 = scmp.ne.s32.totalorder %s232, %s248
      %p250 = scmp.eq.s32.totalorder %s28, 0
      %p251 = por %p249, %p250
      %s252 = ssub.s32 %s29, %s41
      %s253 = ssub.s32 %s30, %s37
      %s254 = sor.u32 %s252, %s253
      %p255 = scmp.eq.s32.totalorder %s254, 0
      %s257 = sadd.s32 %s256, 1
      %s258 = scalar_select %p255, %s256, %s257
      %p261 = pneg %p255
      %p262 = scmp.eq.s32.totalorder %s22, 7
      %p263 = por %p261, %p262
      %p264 = scmp.ne.s32.totalorder %s256, %s259
      %p265 = scmp.eq.s32.totalorder %s22, 0
      %p266 = por %p264, %p265
      %p267 = scmp.ne.s32.totalorder %s256, %s259
      %p268 = scmp.eq.s32.totalorder %s27, 7
      %p269 = por %p267, %p268
      %p270 = scmp.ne.s32.totalorder %s259, %s260
      %p271 = scmp.eq.s32.totalorder %s27, 0
      %p272 = por %p270, %p271
      %p273 = scmp.ne.s32.totalorder %s259, %s260
      %p274 = scmp.eq.s32.totalorder %s28, 7
      %p275 = por %p273, %p274
      %p277 = scmp.ne.s32.totalorder %s260, %s276
      %p278 = scmp.eq.s32.totalorder %s28, 0
      %p279 = por %p277, %p278
      %p280 = scmp.le.s32.totalorder 1, %s22
      %p281 = scmp.lt.s32.totalorder %s22, 9
      %p282 = pnand %p280, %p281
      %p283 = pneg %p282
      // Predicated region
      $region9: #{tpu_custom_call.1} parent=5 // pred_check
        _
      $region10: #{tpu_custom_call.1} parent=5 // pred_check_branch
        %285 = sbr.rel (%p282) target = $region12
      $region11: #{tpu_custom_call.1} parent=5 // pred_region
        %s286 = ssub.s32 %s22, 1
        // Predicated region
        $region13: #{tpu_custom_call.1} parent=11 // pred_check
          %p287 = pneg %p83
        $region14: #{tpu_custom_call.1} parent=11 // pred_check_branch
          %289 = sbr.rel (%p287) target = $region16
        $region15: #{tpu_custom_call.1} parent=11 // pred_region
          _
        $region16: #{tpu_custom_call.1} parent=11 // pred_fallthru
          _
        // Predicated region
        $region17: #{tpu_custom_call.1} parent=11 // pred_check
          %p290 = pneg %p104
        $region18: #{tpu_custom_call.1} parent=11 // pred_check_branch
          %292 = sbr.rel (%p290) target = $region20
        $region19: #{tpu_custom_call.1} parent=11 // pred_region
          _
        $region20: #{tpu_custom_call.1} parent=11 // pred_fallthru
          _
        // Predicated region
        $region21: #{tpu_custom_call.1} parent=11 // pred_check
          %p293 = pneg %p125
        $region22: #{tpu_custom_call.1} parent=11 // pred_check_branch
          %295 = sbr.rel (%p293) target = $region24
        $region23: #{tpu_custom_call.1} parent=11 // pred_region
          _
        $region24: #{tpu_custom_call.1} parent=11 // pred_fallthru
          _
        // Predicated region
        $region25: #{tpu_custom_call.1} parent=11 // pred_check
          %p296 = pneg %p146
        $region26: #{tpu_custom_call.1} parent=11 // pred_check_branch
          %298 = sbr.rel (%p296) target = $region28
        $region27: #{tpu_custom_call.1} parent=11 // pred_region
          _
        $region28: #{tpu_custom_call.1} parent=11 // pred_fallthru
          _
        // Predicated region
        $region29: #{tpu_custom_call.1} parent=11 // pred_check
          %p299 = pneg %p167
        $region30: #{tpu_custom_call.1} parent=11 // pred_check_branch
          %301 = sbr.rel (%p299) target = $region32
        $region31: #{tpu_custom_call.1} parent=11 // pred_region
          _
        $region32: #{tpu_custom_call.1} parent=11 // pred_fallthru
          _
        // Predicated region
        $region33: #{tpu_custom_call.1} parent=11 // pred_check
          %p302 = pneg %p188
        $region34: #{tpu_custom_call.1} parent=11 // pred_check_branch
          %304 = sbr.rel (%p302) target = $region36
        $region35: #{tpu_custom_call.1} parent=11 // pred_region
          _
        $region36: #{tpu_custom_call.1} parent=11 // pred_fallthru
          _
      $region12: #{tpu_custom_call.1} parent=5 // pred_fallthru
        _
      %p305 = scmp.lt.s32.totalorder %s22, 8
      // Predicated region
      $region37: #{tpu_custom_call.1} parent=5 // pred_check
        %p306 = pneg %p305
      $region38: #{tpu_custom_call.1} parent=5 // pred_check_branch
        %308 = sbr.rel (%p306) target = $region40
      $region39: #{tpu_custom_call.1} parent=5 // pred_region
        // Predicated region
        $region41: #{tpu_custom_call.1} parent=39 // pred_check
          %p309 = pneg %p56
        $region42: #{tpu_custom_call.1} parent=39 // pred_check_branch
          %311 = sbr.rel (%p309) target = $region44
        $region43: #{tpu_custom_call.1} parent=39 // pred_region
          %s312 = sand.u32 %s46, 1
          %s313 = sand.u32 %s46, 1
          %s314 = smul.addr %s313, 40
          %s315 = scalar_lea.vmem [#allocation2], %s314
          %s316 = smul.addr %s29, 10
          %s317 = sadd.s32 %s30, %s316
          %s318 = smul.addr %s317, 8
          %s319 = scalar_lea.vmem %s0, %s318
          // Predicated region
          $region45: #{tpu_custom_call.1} parent=43 // pred_check
            _
          $region46: #{tpu_custom_call.1} parent=43 // pred_check_branch
            %321 = sbr.rel (0) target = $region48
          $region47: #{tpu_custom_call.1} parent=43 // pred_region
            // Predicated region
            $region49: #{tpu_custom_call.1} parent=47 // pred_check
              _
            $region50: #{tpu_custom_call.1} parent=47 // pred_check_branch
              %323 = sbr.rel (0) target = $region52
            $region51: #{tpu_custom_call.1} parent=47 // pred_region
              // Predicated region
              $region64: #{tpu_custom_call.1} parent=51 // pred_check
                _
              $region65: #{tpu_custom_call.1} parent=51 // pred_check_branch
                %347 = sbr.rel (0) target = $region67
              $region66: #{tpu_custom_call.1} parent=51 // pred_region
                loop: start=0, step=1, limit=1
                $region68: #{tpu_custom_call.1} parent=66 // loop_pre_header
                  _
                $region69: #{tpu_custom_call.1} parent=66 // loop_header
                  %s349 = sphi 0, %s353
                  %p350 = scmp.ge.s32.totalorder %s349, 1
                  %s354 = sphi %s319, %s319
                  %s355 = sphi %s315, %s315
                $region70: #{tpu_custom_call.1} parent=66 // loop_header_branch
                  %352 = sbr.rel (%p350) target = $region74
                $region71: #{tpu_custom_call.1} parent=66 // loop_body
                  %v356 = vld [vmem:[%s354] sm:$0xff]
                  %357 = vst [vmem:[%s355] sm:$0xff] %v356
                  %v358 = vld [vmem:[%s354 + $0x10] sm:$0xff]
                  %359 = vst [vmem:[%s355 + $0x8] sm:$0xff] %v358
                  %v360 = vld [vmem:[%s354 + $0x20] sm:$0xff]
                  %361 = vst [vmem:[%s355 + $0x10] sm:$0xff] %v360
                  %v362 = vld [vmem:[%s354 + $0x30] sm:$0xff]
                  %363 = vst [vmem:[%s355 + $0x18] sm:$0xff] %v362
                  %v364 = vld [vmem:[%s354 + $0x40] sm:$0xff]
                  %365 = vst [vmem:[%s355 + $0x20] sm:$0xff] %v364
                $region72: #{tpu_custom_call.1} parent=66 // loop_footer
                  %s353 = sadd.s32 1, %s349
                $region73: #{tpu_custom_call.1} parent=66 // loop_footer_branch
                  %348 = sbr.rel target = $region69
                $region74: #{tpu_custom_call.1} parent=66 // loop_exit
                  _
              $region67: #{tpu_custom_call.1} parent=51 // pred_fallthru
                _
              // Predicated region
              $region75: #{tpu_custom_call.1} parent=51 // pred_check
                _
              $region76: #{tpu_custom_call.1} parent=51 // pred_check_branch
                %367 = sbr.rel target = $region78
              $region77: #{tpu_custom_call.1} parent=51 // pred_region
                _
              $region78: #{tpu_custom_call.1} parent=51 // pred_fallthru
                _
            $region52: #{tpu_custom_call.1} parent=47 // pred_fallthru
              _
            // Predicated region
            $region53: #{tpu_custom_call.1} parent=47 // pred_check
              _
            $region54: #{tpu_custom_call.1} parent=47 // pred_check_branch
              %325 = sbr.rel target = $region56
            $region55: #{tpu_custom_call.1} parent=47 // pred_region
              %s327 = ssub.s32 256, 1
              loop: start=0, step=1, limit=1
              $region57: #{tpu_custom_call.1} parent=55 // loop_pre_header
                _
              $region58: #{tpu_custom_call.1} parent=55 // loop_header
                %s329 = sphi 0, %s333
                %p330 = scmp.ge.s32.totalorder %s329, 1
                %s334 = sphi %s319, %s319
                %s335 = sphi %s315, %s315
              $region59: #{tpu_custom_call.1} parent=55 // loop_header_branch
                %332 = sbr.rel (%p330) target = $region63
              $region60: #{tpu_custom_call.1} parent=55 // loop_body
                %v336 = vld [vmem:[%s334] sm:%s327]
                %337 = vst [vmem:[%s335] sm:%s327] %v336
                %v338 = vld [vmem:[%s334 + $0x10] sm:%s327]
                %339 = vst [vmem:[%s335 + $0x8] sm:%s327] %v338
                %v340 = vld [vmem:[%s334 + $0x20] sm:%s327]
                %341 = vst [vmem:[%s335 + $0x10] sm:%s327] %v340
                %v342 = vld [vmem:[%s334 + $0x30] sm:%s327]
                %343 = vst [vmem:[%s335 + $0x18] sm:%s327] %v342
                %v344 = vld [vmem:[%s334 + $0x40] sm:%s327]
                %345 = vst [vmem:[%s335 + $0x20] sm:%s327] %v344
              $region61: #{tpu_custom_call.1} parent=55 // loop_footer
                %s333 = sadd.s32 1, %s329
              $region62: #{tpu_custom_call.1} parent=55 // loop_footer_branch
                %328 = sbr.rel target = $region58
              $region63: #{tpu_custom_call.1} parent=55 // loop_exit
                _
            $region56: #{tpu_custom_call.1} parent=47 // pred_fallthru
              _
          $region48: #{tpu_custom_call.1} parent=43 // pred_fallthru
            _
          %368 = vnop
        $region44: #{tpu_custom_call.1} parent=39 // pred_fallthru
          _
      $region40: #{tpu_custom_call.1} parent=5 // pred_fallthru
        _
      %p369 = scmp.le.s32.totalorder 1, %s22
      %p370 = scmp.lt.s32.totalorder %s22, 9
      %p371 = pnand %p369, %p370
      %p372 = pneg %p371
      // Predicated region
      $region79: #{tpu_custom_call.1} parent=5 // pred_check
        _
      $region80: #{tpu_custom_call.1} parent=5 // pred_check_branch
        %374 = sbr.rel (%p371) target = $region82
      $region81: #{tpu_custom_call.1} parent=5 // pred_region
        %s375 = ssub.s32 %s22, 1
        %s376 = sand.u32 %s49, 1
        %s377 = sand.u32 %s49, 1
        %s378 = smul.addr %s377, 40
        %s379 = scalar_lea.vmem [#allocation2], %s378
        // Predicated region
        $region83: #{tpu_custom_call.1} parent=81 // pred_check
          %p380 = pneg %p62
        $region84: #{tpu_custom_call.1} parent=81 // pred_check_branch
          %382 = sbr.rel (%p380) target = $region86
        $region85: #{tpu_custom_call.1} parent=81 // pred_region
          _
        $region86: #{tpu_custom_call.1} parent=81 // pred_fallthru
          _
        %s383 = sand.u32 %s49, 1
        %s384 = sand.u32 %s49, 1
        %s385 = smul.addr %s384, 40
        %s386 = scalar_lea.vmem [#allocation2], %s385
        %p387 = pneg %p62
        %p388 = pneg %p59
        %p389 = pneg %p83
        %p390 = pneg %p80
        %p391 = pneg %p104
        %p392 = pneg %p101
        %p393 = pneg %p125
        %p394 = pneg %p122
        %p395 = pneg %p146
        %p396 = pneg %p143
        %p397 = pneg %p167
        %p398 = pneg %p164
        %p399 = pneg %p188
        %p400 = pneg %p185
        %p401 = pneg %p216
        %p402 = pneg %p213
        %s403 = sand.u32 %s203, 1
        %s404 = scalar_lea.sflag [#allocation4], %s403
        %s405 = sand.u32 %s203, 1
        %s406 = smul.addr %s405, 4
        %s407 = scalar_lea.vmem [#allocation3], %s406
        %p408 = pneg %p244
        %p409 = pneg %p241
        %s410 = sand.u32 %s27, 1
        %s411 = scalar_lea.sflag [#allocation6], %s410
        %s412 = sand.u32 %s231, 1
        %s413 = smul.addr %s412, 4
        %s414 = scalar_lea.vmem [#allocation5], %s413
        %p415 = pneg %p272
        %p416 = pneg %p269
        %s417 = sand.u32 %s27, 1
        %s418 = scalar_lea.sflag [#allocation6], %s417
        %s419 = sand.u32 %s259, 1
        %s420 = smul.addr %s419, 4
        %s421 = scalar_lea.vmem [#allocation7], %s420
        %v423 = vld [vmem:[%s379] sm:$0xff]
        %v424 = vld [vmem:[%s379 + $0x8] sm:$0xff]
        %v425 = vld [vmem:[%s379 + $0x10] sm:$0xff]
        %v426 = vld [vmem:[%s379 + $0x18] sm:$0xff]
        %v427 = vld [vmem:[%s379 + $0x20] sm:$0xf]
        %v428 = vld [vmem:[%s1] sm:$0xf]
        %v429 = vld [vmem:[%s3] sm:$0xf]
        %431 = vset.pattern.permute.xlu0 0
        %432 = vperm.xlu0 %431, %v428
        %v433 = vpop.permute.xlu0 %432
        %v435 = vmul.f32 %v423, %v433
        %v436 = vadd.f32 %v435, 0.0
        %438 = vset.pattern.permute.xlu0 0
        %439 = vperm.xlu0 %438, %v429
        %v440 = vpop.permute.xlu0 %439
        %v442 = vmul.f32 %v423, %v440
        %v443 = vadd.f32 %v442, 0.0
        %444 = vset.pattern.permute.xlu0 1
        %445 = vperm.xlu0 %444, %v428
        %v446 = vpop.permute.xlu0 %445
        %v447 = vrot.slane %v446, 4
        %v449 = vmul.f32 %v423, %v447
        %v451 = vrot.slane %v449, 4
        %v453 = vadd.f32 %v436, %v451
        %454 = vset.pattern.permute.xlu0 1
        %455 = vperm.xlu0 %454, %v429
        %v456 = vpop.permute.xlu0 %455
        %v457 = vrot.slane %v456, 4
        %v459 = vmul.f32 %v423, %v457
        %v461 = vrot.slane %v459, 4
        %v463 = vadd.f32 %v443, %v461
        %464 = vset.pattern.permute.xlu0 2
        %465 = vperm.xlu0 %464, %v428
        %v466 = vpop.permute.xlu0 %465
        %v468 = vmul.f32 %v424, %v466
        %v469 = vadd.f32 %v453, %v468
        %470 = vset.pattern.permute.xlu0 2
        %471 = vperm.xlu0 %470, %v429
        %v472 = vpop.permute.xlu0 %471
        %v474 = vmul.f32 %v424, %v472
        %v475 = vadd.f32 %v463, %v474
        %476 = vset.pattern.permute.xlu0 3
        %477 = vperm.xlu0 %476, %v428
        %v478 = vpop.permute.xlu0 %477
        %v479 = vrot.slane %v478, 4
        %v481 = vmul.f32 %v424, %v479
        %v483 = vrot.slane %v481, 4
        %v485 = vadd.f32 %v469, %v483
        %486 = vset.pattern.permute.xlu0 3
        %487 = vperm.xlu0 %486, %v429
        %v488 = vpop.permute.xlu0 %487
        %v489 = vrot.slane %v488, 4
        %v491 = vmul.f32 %v424, %v489
        %v493 = vrot.slane %v491, 4
        %v495 = vadd.f32 %v475, %v493
        %496 = vset.pattern.permute.xlu0 4
        %497 = vperm.xlu0 %496, %v428
        %v498 = vpop.permute.xlu0 %497
        %v500 = vmul.f32 %v425, %v498
        %v501 = vadd.f32 %v485, %v500
        %502 = vset.pattern.permute.xlu0 4
        %503 = vperm.xlu0 %502, %v429
        %v504 = vpop.permute.xlu0 %503
        %v506 = vmul.f32 %v425, %v504
        %v507 = vadd.f32 %v495, %v506
        %508 = vset.pattern.permute.xlu0 5
        %509 = vperm.xlu0 %508, %v428
        %v510 = vpop.permute.xlu0 %509
        %v511 = vrot.slane %v510, 4
        %v513 = vmul.f32 %v425, %v511
        %v515 = vrot.slane %v513, 4
        %v517 = vadd.f32 %v501, %v515
        %518 = vset.pattern.permute.xlu0 5
        %519 = vperm.xlu0 %518, %v429
        %v520 = vpop.permute.xlu0 %519
        %v521 = vrot.slane %v520, 4
        %v523 = vmul.f32 %v425, %v521
        %v525 = vrot.slane %v523, 4
        %v527 = vadd.f32 %v507, %v525
        %528 = vset.pattern.permute.xlu0 6
        %529 = vperm.xlu0 %528, %v428
        %v530 = vpop.permute.xlu0 %529
        %v532 = vmul.f32 %v426, %v530
        %v533 = vadd.f32 %v517, %v532
        %534 = vset.pattern.permute.xlu0 6
        %535 = vperm.xlu0 %534, %v429
        %v536 = vpop.permute.xlu0 %535
        %v538 = vmul.f32 %v426, %v536
        %v539 = vadd.f32 %v527, %v538
        %540 = vset.pattern.permute.xlu0 7
        %541 = vperm.xlu0 %540, %v428
        %v542 = vpop.permute.xlu0 %541
        %v543 = vrot.slane %v542, 4
        %v545 = vmul.f32 %v426, %v543
        %v547 = vrot.slane %v545, 4
        %v549 = vadd.f32 %v533, %v547
        %550 = vset.pattern.permute.xlu0 7
        %551 = vperm.xlu0 %550, %v429
        %v552 = vpop.permute.xlu0 %551
        %v553 = vrot.slane %v552, 4
        %v555 = vmul.f32 %v426, %v553
        %v557 = vrot.slane %v555, 4
        %v559 = vadd.f32 %v539, %v557
        %560 = vset.pattern.permute.xlu0 8
        %561 = vperm.xlu0 %560, %v428
        %v562 = vpop.permute.xlu0 %561
        %v564 = vmul.f32 %v427, %v562
        %v565 = vadd.f32 %v549, %v564
        %566 = vset.pattern.permute.xlu0 8
        %567 = vperm.xlu0 %566, %v429
        %v568 = vpop.permute.xlu0 %567
        %v570 = vmul.f32 %v427, %v568
        %v571 = vadd.f32 %v559, %v570
        %v572 = vld [vmem:[%s2] sm:$0xf]
        %574 = vset.pattern.permute.xlu0 0
        %575 = vperm.xlu0 %574, %v572
        %v576 = vpop.permute.xlu0 %575
        %v578 = vadd.f32 %v565, %v576
        %579 = vst [vmem:[%s407] sm:$0xf] %v578
        %v580 = vld [vmem:[%s4] sm:$0xf]
        %582 = vset.pattern.permute.xlu0 0
        %583 = vperm.xlu0 %582, %v580
        %v584 = vpop.permute.xlu0 %583
        %v586 = vadd.f32 %v571, %v584
        %587 = vst [vmem:[%s414] sm:$0xf] %v586
        %v588 = vld [vmem:[%s5] sm:$0xf]
        %v589 = vpack.c.bf16 %v588, %v588
        %v590 = vpack.c.bf16 %v424, %v423
        %v591 = vpack.c.bf16 %v426, %v425
        %v592 = vpack.c.bf16 %v427, %v427
        %v593 = vld [vmem:[%s6] sm:$0xf]
        %595 = vset.pattern.permute.xlu0 0
        %596 = vperm.xlu0 %595, %v593
        %v597 = vpop.permute.xlu0 %596
        %vm599 = vcmask 293888
        %v601 = vsel %vm599, %v589, 0
        %vm603 = vcmask 1041408
        %v605 = vsel %vm603, %v592, 0
        %607 = vmatpush.bf16.msra.mxu0 0
        %608 = vmatpush.bf16.msra.mxu0 0
        %609 = vmatpush.bf16.msra.mxu0 0
        %610 = vmatpush.bf16.msra.mxu0 0
        %611 = vmatpush.bf16.msra.mxu0 0
        %612 = vmatpush.bf16.msra.mxu0 %v605
        %613 = vmatpush.bf16.msra.mxu0 %v591
        %614 = vmatpush.bf16.msra.mxu0 %v590
        %615 = vmatmul.bf16.gmra.mxu0 %v601
        %v616 = vpop.f32.mrf.mxu0
        %v617 = vadd.f32 %v597, %v616
        %v618 = vpop.f32.mrf.mxu0
        %619 = vdwg.mxu0
        %620 = vst [vmem:[%s421] sm:$0xf] %v617
        %s621 = sand.u32 %s203, 1
        %s622 = scalar_lea.sflag [#allocation4], %s621
        %s623 = sand.u32 %s203, 1
        %s624 = smul.addr %s623, 4
        %s625 = scalar_lea.vmem [#allocation3], %s624
        %s626 = sand.u32 %s27, 1
        %s627 = scalar_lea.sflag [#allocation6], %s626
        %s628 = sand.u32 %s231, 1
        %s629 = smul.addr %s628, 4
        %s630 = scalar_lea.vmem [#allocation5], %s629
        %s631 = sand.u32 %s27, 1
        %s632 = scalar_lea.sflag [#allocation6], %s631
        %s633 = sand.u32 %s259, 1
        %s634 = smul.addr %s633, 4
        %s635 = scalar_lea.vmem [#allocation7], %s634
        // Predicated region
        $region87: #{tpu_custom_call.1} parent=81 // pred_check
          %p636 = pneg %p213
        $region88: #{tpu_custom_call.1} parent=81 // pred_check_branch
          %638 = sbr.rel (%p636) target = $region90
        $region89: #{tpu_custom_call.1} parent=81 // pred_region
          %640 = vsyncadd %s622, 0
          %s641 = smul.addr %s31, 2
          %s642 = sadd.s32 %s32, %s641
          %s643 = smul.addr %s642, 4
          %s644 = scalar_lea.hbm %s7, %s643
          %s646 = sshll.u32 %s625, 4
          %s647 = int_to_ptr.vmem [resolvable:$true] %s646
          %s648 = sshll.u32 %s644, 4
          %s649 = int_to_ptr.hbm [resolvable:$true] %s648
          %651 = dma.vmem_to_hbm [thread:$0]  %s647, 64, %s649, %s622
        $region90: #{tpu_custom_call.1} parent=81 // pred_fallthru
          _
        // Predicated region
        $region91: #{tpu_custom_call.1} parent=81 // pred_check
          %p652 = pneg %p241
        $region92: #{tpu_custom_call.1} parent=81 // pred_check_branch
          %654 = sbr.rel (%p652) target = $region94
        $region93: #{tpu_custom_call.1} parent=81 // pred_region
          %656 = vsyncadd %s627, 0
          %s657 = smul.addr %s31, 2
          %s658 = sadd.s32 %s32, %s657
          %s659 = smul.addr %s658, 4
          %s660 = scalar_lea.hbm %s8, %s659
          %s662 = sshll.u32 %s630, 4
          %s663 = int_to_ptr.vmem [resolvable:$true] %s662
          %s664 = sshll.u32 %s660, 4
          %s665 = int_to_ptr.hbm [resolvable:$true] %s664
          %667 = dma.vmem_to_hbm [thread:$0]  %s663, 64, %s665, %s627
        $region94: #{tpu_custom_call.1} parent=81 // pred_fallthru
          _
        // Predicated region
        $region95: #{tpu_custom_call.1} parent=81 // pred_check
          %p668 = pneg %p269
        $region96: #{tpu_custom_call.1} parent=81 // pred_check_branch
          %670 = sbr.rel (%p668) target = $region98
        $region97: #{tpu_custom_call.1} parent=81 // pred_region
          %672 = vsyncadd %s632, 0
          %s673 = smul.addr %s31, 2
          %s674 = sadd.s32 %s32, %s673
          %s675 = smul.addr %s674, 4
          %s676 = scalar_lea.hbm %s9, %s675
          %s678 = sshll.u32 %s635, 4
          %s679 = int_to_ptr.vmem [resolvable:$true] %s678
          %s680 = sshll.u32 %s676, 4
          %s681 = int_to_ptr.hbm [resolvable:$true] %s680
          %683 = dma.vmem_to_hbm [thread:$0]  %s679, 64, %s681, %s632
        $region98: #{tpu_custom_call.1} parent=81 // pred_fallthru
          _
      $region82: #{tpu_custom_call.1} parent=5 // pred_fallthru
        _
      %p684 = scmp.le.s32.totalorder 2, %s22
      // Predicated region
      $region99: #{tpu_custom_call.1} parent=5 // pred_check
        %p685 = pneg %p684
      $region100: #{tpu_custom_call.1} parent=5 // pred_check_branch
        %687 = sbr.rel (%p685) target = $region102
      $region101: #{tpu_custom_call.1} parent=5 // pred_region
        %s688 = ssub.s32 %s22, 2
        // Predicated region
        $region103: #{tpu_custom_call.1} parent=101 // pred_check
          %p689 = pneg %p219
        $region104: #{tpu_custom_call.1} parent=101 // pred_check_branch
          %691 = sbr.rel (%p689) target = $region106
        $region105: #{tpu_custom_call.1} parent=101 // pred_region
          %s692 = sand.u32 %s204, 1
          %s693 = scalar_lea.sflag [#allocation4], %s692
          %s694 = sand.u32 %s204, 1
          %s695 = smul.addr %s694, 4
          %s696 = scalar_lea.vmem [#allocation3], %s695
          %698 = dma.done %s693, 64
        $region106: #{tpu_custom_call.1} parent=101 // pred_fallthru
          _
        // Predicated region
        $region107: #{tpu_custom_call.1} parent=101 // pred_check
          %p699 = pneg %p247
        $region108: #{tpu_custom_call.1} parent=101 // pred_check_branch
          %701 = sbr.rel (%p699) target = $region110
        $region109: #{tpu_custom_call.1} parent=101 // pred_region
          %s702 = sand.u32 %s28, 1
          %s703 = scalar_lea.sflag [#allocation6], %s702
          %s704 = sand.u32 %s232, 1
          %s705 = smul.addr %s704, 4
          %s706 = scalar_lea.vmem [#allocation5], %s705
          %708 = dma.done %s703, 64
        $region110: #{tpu_custom_call.1} parent=101 // pred_fallthru
          _
        // Predicated region
        $region111: #{tpu_custom_call.1} parent=101 // pred_check
          %p709 = pneg %p275
        $region112: #{tpu_custom_call.1} parent=101 // pred_check_branch
          %711 = sbr.rel (%p709) target = $region114
        $region113: #{tpu_custom_call.1} parent=101 // pred_region
          %s712 = sand.u32 %s28, 1
          %s713 = scalar_lea.sflag [#allocation6], %s712
          %s714 = sand.u32 %s260, 1
          %s715 = smul.addr %s714, 4
          %s716 = scalar_lea.vmem [#allocation7], %s715
          %718 = dma.done %s713, 64
        $region114: #{tpu_custom_call.1} parent=101 // pred_fallthru
          _
      $region102: #{tpu_custom_call.1} parent=5 // pred_fallthru
        _
    $region6: #{tpu_custom_call.1} parent=1 // loop_footer
      %s26 = sadd.s32 1, %s22
    $region7: #{tpu_custom_call.1} parent=1 // loop_footer_branch
      %21 = sbr.rel target = $region3
    $region8: #{tpu_custom_call.1} parent=1 // loop_exit
      _
    %719 = vsyncpa [#allocation4], 1
    %s720 = scalar_lea.sflag [#allocation4], 1
    %721 = vsyncpa %s720, 1
    %722 = vsyncpa [#allocation6], 1
    %s723 = scalar_lea.sflag [#allocation6], 1
    %724 = vsyncpa %s723, 1

</llo_original>
